<compile_context>
chip_gen: v5e
topology: v5e:2x2
jax: 0.10.0
libtpu: 0.0.40
codegen_flags: <defaults>
</compile_context>

<pallas_src>
import functools

import jax
import jax.numpy as jnp
from jax import lax
from jax.experimental import pallas as pl
from jax.experimental.pallas import tpu as pltpu

_LANES = 128


# ----------------------------------------------------------------------------
# Pallas kernel: fused (error = p - t) and per-tile partial sum of (p - t)^2
# ----------------------------------------------------------------------------
def _mse_kernel(rows, tile_rows, needs_mask, p_ref, t_ref, err_ref, psum_ref):
    # p_ref, t_ref : (tile_rows, 128) tiles in the inputs' native dtype
    # err_ref      : (tile_rows, 128) tile of `error` (native result dtype)
    # psum_ref     : (8, 128) f32 partial-sum block, one per grid step
    diff = p_ref[...].astype(jnp.float32) - t_ref[...].astype(jnp.float32)
    err_ref[...] = diff.astype(err_ref.dtype)

    sq = diff * diff
    if needs_mask:
        # Last grid block may hang past `rows`; those rows contain
        # unspecified data (Pallas pads partial blocks) -> mask them out of
        # the reduction.  jnp.where is a select, so NaN/Inf garbage is safe.
        i = pl.program_id(0)
        valid = rows - i * tile_rows
        row_id = lax.broadcasted_iota(jnp.int32, sq.shape, 0)
        sq = jnp.where(row_id < valid, sq, 0.0)

    # Sublane / cross-vreg reduce only (VALU + one XLU step); no cross-lane
    # reduce and no serialized scalar accumulator.  Broadcast the (1,128)
    # column sums over the 8 sublanes so the output block is full-width;
    # the wrapper divides the grand total by 8.
    col_sums = jnp.sum(sq, axis=0, keepdims=True)            # (1, 128)
    psum_ref[...] = jnp.broadcast_to(col_sums, psum_ref.shape)


# ----------------------------------------------------------------------------
# Host wrapper: lane-dense view + pallas_call (jitted as one executable)
# ----------------------------------------------------------------------------
def _mse_forward_impl(prediction, target):
    orig_shape = prediction.shape
    err_dtype = jnp.result_type(prediction.dtype, target.dtype)
    total = prediction.size                      # static at trace time

    p_flat = prediction.reshape(-1)
    t_flat = target.reshape(-1)

    # Minimal padding: only to the next multiple of 128 lanes, and only when
    # needed (zeros contribute 0 to the sum; divisor stays the true count).
    pad = (-total) % _LANES
    if pad:
        p_flat = jnp.pad(p_flat, (0, pad))
        t_flat = jnp.pad(t_flat, (0, pad))
    rows = (total + pad) // _LANES

    tile_rows = min(1024, ((rows + 7) // 8) * 8)  # sublane-aligned tile rows
    num_tiles = pl.cdiv(rows, tile_rows)
    needs_mask = (rows % tile_rows) != 0          # static Python bool

    p2 = p_flat.reshape(rows, _LANES)
    t2 = t_flat.reshape(rows, _LANES)

    kernel = functools.partial(_mse_kernel, rows, tile_rows, needs_mask)

    err2, psums = pl.pallas_call(
        kernel,
        out_shape=(
            jax.ShapeDtypeStruct((rows, _LANES), err_dtype),
            jax.ShapeDtypeStruct((num_tiles * 8, _LANES), jnp.float32),
        ),
        grid_spec=pltpu.PrefetchScalarGridSpec(
            num_scalar_prefetch=0,
            grid=(num_tiles,),
            in_specs=[
                pl.BlockSpec((tile_rows, _LANES), lambda i: (i, 0)),
                pl.BlockSpec((tile_rows, _LANES), lambda i: (i, 0)),
            ],
            out_specs=[
                pl.BlockSpec((tile_rows, _LANES), lambda i: (i, 0)),
                pl.BlockSpec((8, _LANES), lambda i: (i, 0)),
            ],
        ),
        compiler_params=pltpu.CompilerParams(
            # Per-program partial sums -> no cross-iteration dependency, so
            # the grid axis is "parallel" (lets v7x use both TensorCores).
            dimension_semantics=("parallel",),
        ),
    )(p2, t2)

    # Each partial block holds the same (1,128) column sums replicated over
    # 8 sublanes -> grand total is 8x the true sum of squares.
    loss = (jnp.sum(psums, dtype=jnp.float32) * (1.0 / (8.0 * total))).astype(err_dtype)

    if pad:
        error = err2.reshape(-1)[:total].reshape(orig_shape)
    else:
        error = err2.reshape(orig_shape)          # pure metadata reshape
    return error, loss


_mse_forward = jax.jit(_mse_forward_impl)


# ----------------------------------------------------------------------------
# Module re-implementation (forward semantics of Miniproject_2 MSE)
# ----------------------------------------------------------------------------
class MSEPallas:
    """MSE loss: forward(prediction, target) -> mean((prediction - target)^2).

    Stores `self.error = prediction - target` (as the original module does)
    so backward() can return 2/N * error.
    """

    def __init__(self):
        self.error = None

    def forward(self, *input):
        prediction, target = jnp.asarray(input[0]), jnp.asarray(input[1])
        if prediction.size == 0:
            # mean over an empty tensor -> NaN (matches torch semantics).
            self.error = jnp.zeros(prediction.shape, prediction.dtype)
            return jnp.array(jnp.nan, dtype=jnp.float32)
        error, loss = _mse_forward(prediction, target)
        self.error = error
        return loss

    def backward(self, *gradwrtoutput):
        # gradwrtoutput is unused (MSE assumed to be the last module).
        return (2.0 / self.error.size) * self.error

    def param(self):
        return []


# ----------------------------------------------------------------------------
# Self-test
# ----------------------------------------------------------------------------
if __name__ == "__main__":
    key = jax.random.PRNGKey(0)
    k1, k2, k3, k4, k5, k6 = jax.random.split(key, 6)

    mse = MSEPallas()

    # Case 1: small NCHW tensors (single-tile, lane-aligned path).
    pred = jax.random.normal(k1, (2, 4, 16, 16), dtype=jnp.float32)
    targ = jax.random.normal(k2, (2, 4, 16, 16), dtype=jnp.float32)
    loss = jax.block_until_ready(mse.forward(pred, targ))

    ref_err = pred - targ
    ref_loss = jnp.mean(ref_err ** 2)
    assert loss.shape == (), loss.shape
    assert jnp.allclose(loss, ref_loss, atol=1e-6, rtol=1e-5), (
        float(loss), float(ref_loss))
    assert mse.error.shape == pred.shape
    assert jnp.allclose(mse.error, ref_err, atol=1e-6, rtol=1e-6)

    grad = jax.block_until_ready(mse.backward())
    ref_grad = 2.0 / ref_err.size * ref_err
    assert jnp.allclose(grad, ref_grad, atol=1e-6, rtol=1e-6)

    # Case 2: non-128-aligned total (exercises minimal pad + in-kernel mask).
    pred2 = jax.random.normal(k3, (3, 5, 37, 17), dtype=jnp.float32)
    targ2 = jax.random.normal(k4, (3, 5, 37, 17), dtype=jnp.float32)
    loss2 = jax.block_until_ready(mse.forward(pred2, targ2))
    ref_err2 = pred2 - targ2
    ref_loss2 = jnp.mean(ref_err2 ** 2)
    assert jnp.allclose(loss2, ref_loss2, atol=1e-6, rtol=1e-5), (
        float(loss2), float(ref_loss2))
    assert jnp.allclose(mse.error, ref_err2, atol=1e-6, rtol=1e-6)

    # Case 3: multi-tile grid with a partial last tile (mask path, parallel axis).
    pred3 = jax.random.normal(k5, (4, 8, 80, 80), dtype=jnp.float32)
    targ3 = jax.random.normal(k6, (4, 8, 80, 80), dtype=jnp.float32)
    loss3 = jax.block_until_ready(mse.forward(pred3, targ3))
    ref_loss3 = jnp.mean((pred3 - targ3) ** 2)
    assert jnp.allclose(loss3, ref_loss3, atol=1e-6, rtol=1e-5), (
        float(loss3), float(ref_loss3))

    print("KERNEL_OK")
</pallas_src>

<mosaic_0001>
module attributes {stable_mosaic.version = 11 : i64} {
  func.func @_mse_kernel(%arg0: i32, %arg1: memref<16x128xf32, #tpu.memory_space<vmem>>, %arg2: memref<16x128xf32, #tpu.memory_space<vmem>>, %arg3: memref<16x128xf32, #tpu.memory_space<vmem>>, %arg4: memref<8x128xf32, #tpu.memory_space<vmem>>) attributes {dimension_semantics = [#tpu.dimension_semantics<parallel>], iteration_bounds = array<i64: 1>, scalar_prefetch = 0 : i64, scratch_operands = 0 : i64, tpu.core_type = #tpu.core_type<tc>, window_params = [{transform_indices = @transform_0, window_bounds = array<i64: 16, 128>}, {transform_indices = @transform_1, window_bounds = array<i64: 16, 128>}, {transform_indices = @transform_2, window_bounds = array<i64: 16, 128>}, {transform_indices = @transform_3, window_bounds = array<i64: 8, 128>}]} {
    %c0 = arith.constant 0 : index
    %c0_0 = arith.constant 0 : index
    %0 = vector.load %arg1[%c0, %c0_0] : memref<16x128xf32, #tpu.memory_space<vmem>>, vector<16x128xf32>
    %c0_1 = arith.constant 0 : index
    %c0_2 = arith.constant 0 : index
    %1 = vector.load %arg2[%c0_1, %c0_2] : memref<16x128xf32, #tpu.memory_space<vmem>>, vector<16x128xf32>
    %2 = arith.subf %0, %1 : vector<16x128xf32>
    %c0_3 = arith.constant 0 : index
    %c0_4 = arith.constant 0 : index
    %3 = vector.load %arg3[%c0_3, %c0_4] : memref<16x128xf32, #tpu.memory_space<vmem>>, vector<16x128xf32>
    tpu.vector_store %arg3[%c0_3, %c0_4], %2 {strides = array<i32>} : memref<16x128xf32, #tpu.memory_space<vmem>>, vector<16x128xf32>,
    %4 = arith.mulf %2, %2 : vector<16x128xf32>
    %cst = arith.constant dense<0.000000e+00> : vector<128xf32>
    %5 = vector.multi_reduction <add>, %4, %cst [0] : vector<16x128xf32> to vector<128xf32>
    %6 = vector.shape_cast %5 : vector<128xf32> to vector<1x128xf32>
    %7 = vector.shape_cast %6 : vector<1x128xf32> to vector<1x128xf32>
    %8 = vector.broadcast %7 : vector<1x128xf32> to vector<8x128xf32>
    %c0_5 = arith.constant 0 : index
    %c0_6 = arith.constant 0 : index
    %9 = vector.load %arg4[%c0_5, %c0_6] : memref<8x128xf32, #tpu.memory_space<vmem>>, vector<8x128xf32>
    tpu.vector_store %arg4[%c0_5, %c0_6], %8 {strides = array<i32>} : memref<8x128xf32, #tpu.memory_space<vmem>>, vector<8x128xf32>,
    return
  }
  func.func @transform_0(%arg0: i32) -> (i32, i32) {
    %c0_i32 = arith.constant 0 : i32
    %c0_i32_0 = arith.constant 0 : i32
    return %arg0, %c0_i32 : i32, i32
  }
  func.func @transform_1(%arg0: i32) -> (i32, i32) {
    %c0_i32 = arith.constant 0 : i32
    %c0_i32_0 = arith.constant 0 : i32
    return %arg0, %c0_i32 : i32, i32
  }
  func.func @transform_2(%arg0: i32) -> (i32, i32) {
    %c0_i32 = arith.constant 0 : i32
    %c0_i32_0 = arith.constant 0 : i32
    return %arg0, %c0_i32 : i32, i32
  }
  func.func @transform_3(%arg0: i32) -> (i32, i32) {
    %c0_i32 = arith.constant 0 : i32
    %c0_i32_0 = arith.constant 0 : i32
    return %arg0, %c0_i32 : i32, i32
  }
}

</mosaic_0001>

<llo_original>
// kernel: _mse_forward_impl.1
$region0: #{_mse_forward_impl.1}
  #allocation0 [shape = 'u32[]', space=smem, size = 0x4, offset = 0x4, fixed_abs, tag = 'smem constant byte address 0x4 - core index']
  #allocation1 [shape = 'u32[72,128]{1,0:T(1,128)}', space=vmem, size = 0x9000, scoped, tag = 'internal scratch']
  %s0 = inlined_call_operand.vmem [shape: f32[16,128], index: 0, kind: input, shape index: {}]
  %s1 = inlined_call_operand.vmem [shape: f32[16,128], index: 1, kind: input, shape index: {}]
  %s2 = inlined_call_operand.vmem [shape: f32[16,128], index: 2, kind: output, shape index: {0}]
  %s3 = inlined_call_operand.vmem [shape: f32[8,128], index: 3, kind: output, shape index: {1}]
  %4 = xla_tuple %s2, %s3
  %s5 = sld [smem:[#allocation0]]
  $region26: #{_mse_forward_impl.1} parent=0
    _
  %s7 = ssub.s32 1, %s5
  %s8 = scalar_select 0, %s7, %s5
  // Predicated region
  $region2: #{_mse_forward_impl.1} parent=0 // pred_check
    _
  $region3: #{_mse_forward_impl.1} parent=0 // pred_check_branch
    %10 = sbr.rel (0) target = $region5
  $region4: #{_mse_forward_impl.1} parent=0 // pred_region
    _
  $region5: #{_mse_forward_impl.1} parent=0 // pred_fallthru
    _
  // Predicated region
  $region6: #{_mse_forward_impl.1} parent=0 // pred_check
    _
  $region7: #{_mse_forward_impl.1} parent=0 // pred_check_branch
    %12 = sbr.rel (0) target = $region9
  $region8: #{_mse_forward_impl.1} parent=0 // pred_region
    _
  $region9: #{_mse_forward_impl.1} parent=0 // pred_fallthru
    _
  %v13 = vld [vmem:[%s0] sm:$0xff]
  %v14 = vld [vmem:[%s0 + $0x8] sm:$0xff]
  %v15 = vld [vmem:[%s1] sm:$0xff]
  %v16 = vld [vmem:[%s1 + $0x8] sm:$0xff]
  %v17 = vsub.f32 %v13, %v15
  %v18 = vsub.f32 %v14, %v16
  %19 = vst [vmem:[%s2] sm:$0xff] %v17
  %20 = vst [vmem:[%s2 + $0x8] sm:$0xff] %v18
  %v21 = vmul.f32 %v17, %v17
  %v22 = vmul.f32 %v18, %v18
  %v23 = vadd.f32 %v21, %v22
  %v24 = vrot.slane %v23, 4
  %v25 = vadd.f32 %v23, %v24
  %v26 = vrot.slane %v25, 2
  %v27 = vadd.f32 %v25, %v26
  %v28 = vrot.slane %v27, 1
  %v29 = vadd.f32 %v27, %v28
  %30 = vst [vmem:[%s3] sm:$0xff] %v29
  // Predicated region
  $region10: #{_mse_forward_impl.1} parent=0 // pred_check
    _
  $region11: #{_mse_forward_impl.1} parent=0 // pred_check_branch
    %32 = sbr.rel (0) target = $region13
  $region12: #{_mse_forward_impl.1} parent=0 // pred_region
    _
  $region13: #{_mse_forward_impl.1} parent=0 // pred_fallthru
    _
  // Predicated region
  $region14: #{_mse_forward_impl.1} parent=0 // pred_check
    _
  $region15: #{_mse_forward_impl.1} parent=0 // pred_check_branch
    %34 = sbr.rel (0) target = $region17
  $region16: #{_mse_forward_impl.1} parent=0 // pred_region
    _
  $region17: #{_mse_forward_impl.1} parent=0 // pred_fallthru
    _
  // Predicated region
  $region18: #{_mse_forward_impl.1} parent=0 // pred_check
    _
  $region19: #{_mse_forward_impl.1} parent=0 // pred_check_branch
    %36 = sbr.rel (0) target = $region21
  $region20: #{_mse_forward_impl.1} parent=0 // pred_region
    _
  $region21: #{_mse_forward_impl.1} parent=0 // pred_fallthru
    _
  // Predicated region
  $region22: #{_mse_forward_impl.1} parent=0 // pred_check
    _
  $region23: #{_mse_forward_impl.1} parent=0 // pred_check_branch
    %38 = sbr.rel (0) target = $region25
  $region24: #{_mse_forward_impl.1} parent=0 // pred_region
    _
  $region25: #{_mse_forward_impl.1} parent=0 // pred_fallthru
    _

</llo_original>
